<compile_context>
chip_gen: v6e
topology: v6e:2x2x1
jax: 0.10.0
libtpu: 0.0.40
codegen_flags: <defaults>
</compile_context>

<pallas_src>
import jax
import jax.numpy as jnp
import numpy as np
from jax import lax
from jax.experimental import pallas as pl
from jax.experimental.pallas import tpu as pltpu


def _pixel_corr_kernel(ker_ref, x_ref, o_ref):
    # ker_ref: (Bt, C, K2)   pooled template block (resident across HW tiles)
    # x_ref:   (Bt, C, THW)  test-frame feature tile (spatial on the lane axis)
    # o_ref:   (Bt, K2, THW) correlation output tile
    out = lax.dot_general(
        ker_ref[...], x_ref[...],
        dimension_numbers=(((1,), (1,)), ((0,), (0,))),  # per-sample ker^T @ x
        preferred_element_type=jnp.float32)
    o_ref[...] = out.astype(o_ref.dtype)


def _round_up(v, m):
    return -(-v // m) * m


def pixel_corr(x, kernel, *, compute_dtype=None, use_pallas=None,
               vmem_tile_budget_bytes=12 * 2**20):
    """Pallas equivalent of PixelCorr.pixel_corr.

    Args:
      x:      (B, C, H, W)   test-frame features (NCHW, like PyTorch).
      kernel: (B, C, Kh, Kw) PrRoIPool'ed reference features (NCHW).
      compute_dtype: optional dtype to cast inputs to before the kernel
        (e.g. jnp.bfloat16 on v6e/v7x to halve HBM traffic); accumulation is
        always f32 and the output keeps x's dtype.
      use_pallas: force (True) / skip (False) the Pallas path; default is a
        size heuristic (tiny problems go to a plain fused einsum).
    Returns:
      (B, Kh*Kw, H, W) correlation volume, dtype of x.
    """
    B, C, H, W = x.shape
    Bk, Ck, Kh, Kw = kernel.shape
    assert B == Bk and C == Ck
    K2, HW = Kh * Kw, H * W
    out_dtype = x.dtype

    if use_pallas is None:
        # At tiny sizes the fixed pallas_call / per-step overhead dominates;
        # XLA's fused batched matmul is faster there.
        use_pallas = (B * C * HW * K2) >= (1 << 22)
    if not use_pallas:
        return jnp.einsum("bck,bchw->bkhw",
                          kernel.reshape(B, C, K2), x).astype(out_dtype)

    cdt = jnp.dtype(compute_dtype) if compute_dtype is not None else jnp.dtype(x.dtype)

    # Spatial tile: lane-dense output (multiple of 128); tile very large HW so
    # a step's tiles fit comfortably in VMEM on every generation.
    if _round_up(HW, 128) <= 4096:
        thw = _round_up(HW, 128)
    else:
        thw = 2048
    hw_pad = _round_up(HW, thw)

    # Batch block: largest divisor of B whose double-buffered in+out tiles fit
    # the budget (safe under v5e's 16 MiB scoped default / v7x's 64 MiB VMEM).
    per_sample_bytes = (2 * (C * thw + C * K2) * cdt.itemsize
                        + 2 * K2 * thw * jnp.dtype(out_dtype).itemsize)
    bt = 1
    for cand in range(1, B + 1):
        if B % cand == 0 and cand * per_sample_bytes <= vmem_tile_budget_bytes:
            bt = cand
    # Keep >=2 grid steps when possible so v7x's two TensorCores both get work.
    if B >= 2 and (B // bt) * (hw_pad // thw) < 2:
        bt = max(d for d in range(1, B) if B % d == 0 and B // d >= 2)

    # Glue reshapes (plain JAX). NOTE: no transpose of the template — the MXU
    # contracts over C directly inside the kernel.
    x_r = x.reshape(B, C, HW)
    ker_r = kernel.reshape(B, C, K2)
    if cdt != jnp.dtype(x.dtype):
        x_r = x_r.astype(cdt)
        ker_r = ker_r.astype(cdt)
    if hw_pad != HW:
        x_r = jnp.pad(x_r, ((0, 0), (0, 0), (0, hw_pad - HW)))

    out = pl.pallas_call(
        _pixel_corr_kernel,
        out_shape=jax.ShapeDtypeStruct((B, K2, hw_pad), out_dtype),
        grid_spec=pltpu.PrefetchScalarGridSpec(
            num_scalar_prefetch=0,
            grid=(B // bt, hw_pad // thw),
            in_specs=[
                # template block: index_map independent of the HW axis so it
                # stays resident in VMEM instead of being re-DMA'd per tile.
                pl.BlockSpec((bt, C, K2), lambda b, s: (b, 0, 0)),
                pl.BlockSpec((bt, C, thw), lambda b, s: (b, 0, s)),
            ],
            out_specs=pl.BlockSpec((bt, K2, thw), lambda b, s: (b, 0, s)),
        ),
        compiler_params=pltpu.CompilerParams(
            dimension_semantics=("parallel", "parallel")),
    )(ker_r, x_r)

    if hw_pad != HW:
        out = out[:, :, :HW]
    return out.reshape(B, K2, H, W)


if __name__ == "__main__":
    key = jax.random.PRNGKey(0)
    k1, k2, k3, k4 = jax.random.split(key, 4)

    # Case 1: shapes consistent with the module: batch=2, channels=4,
    # 16x16 test features, pool_size=4 template.  Force the Pallas path so
    # the kernel itself is exercised (heuristic would route this to einsum).
    B, C, H, W, POOL = 2, 4, 16, 16, 4
    feat2 = jax.random.normal(k1, (B, C, H, W), dtype=jnp.float32)
    # Deterministic stand-in for the PrRoIPool2D(pool_size=4) output of the
    # reference frame (the "kernel" argument of pixel_corr).
    feat_roi1 = jax.random.normal(k2, (B, C, POOL, POOL), dtype=jnp.float32)

    corr = jax.block_until_ready(pixel_corr(feat2, feat_roi1, use_pallas=True))
    ref = jnp.einsum("bck,bchw->bkhw",
                     feat_roi1.reshape(B, C, POOL * POOL), feat2)
    assert corr.shape == (B, POOL * POOL, H, W)
    np.testing.assert_allclose(np.asarray(corr), np.asarray(ref),
                               rtol=1e-5, atol=1e-5)

    # Case 2: non-multiple-of-128 spatial size (15x15 -> padded lanes) and a
    # batch block Bt > 1, to exercise the padding + batched-block paths.
    B2, C2, H2, W2, POOL2 = 4, 8, 15, 15, 3
    feat2b = jax.random.normal(k3, (B2, C2, H2, W2), dtype=jnp.float32)
    roi1b = jax.random.normal(k4, (B2, C2, POOL2, POOL2), dtype=jnp.float32)
    corr2 = jax.block_until_ready(pixel_corr(feat2b, roi1b, use_pallas=True))
    ref2 = jnp.einsum("bck,bchw->bkhw",
                      roi1b.reshape(B2, C2, POOL2 * POOL2), feat2b)
    assert corr2.shape == (B2, POOL2 * POOL2, H2, W2)
    np.testing.assert_allclose(np.asarray(corr2), np.asarray(ref2),
                               rtol=1e-5, atol=1e-5)

    print("KERNEL_OK")
</pallas_src>

<mosaic_0001>
module attributes {stable_mosaic.version = 11 : i64} {
  func.func @_pixel_corr_kernel(%arg0: i32, %arg1: i32, %arg2: memref<1x4x16xf32, #tpu.memory_space<vmem>>, %arg3: memref<1x4x256xf32, #tpu.memory_space<vmem>>, %arg4: memref<1x16x256xf32, #tpu.memory_space<vmem>>) attributes {dimension_semantics = [#tpu.dimension_semantics<parallel>, #tpu.dimension_semantics<parallel>], iteration_bounds = array<i64: 2, 1>, scalar_prefetch = 0 : i64, scratch_operands = 0 : i64, tpu.core_type = #tpu.core_type<tc>, window_params = [{transform_indices = @transform_0, window_bounds = array<i64: 1, 4, 16>}, {transform_indices = @transform_1, window_bounds = array<i64: 1, 4, 256>}, {transform_indices = @transform_2, window_bounds = array<i64: 1, 16, 256>}]} {
    %c0 = arith.constant 0 : index
    %c0_0 = arith.constant 0 : index
    %c0_1 = arith.constant 0 : index
    %0 = vector.load %arg2[%c0, %c0_0, %c0_1] : memref<1x4x16xf32, #tpu.memory_space<vmem>>, vector<1x4x16xf32>
    %c0_2 = arith.constant 0 : index
    %c0_3 = arith.constant 0 : index
    %c0_4 = arith.constant 0 : index
    %1 = vector.load %arg3[%c0_2, %c0_3, %c0_4] : memref<1x4x256xf32, #tpu.memory_space<vmem>>, vector<1x4x256xf32>
    %cst = arith.constant dense<0.000000e+00> : vector<1x16x256xf32>
    %2 = tpu.matmul %0, %1, %cst {dimension_numbers = #tpu.dot_dimension_numbers<[1], [1], [2], [2], [0, 0, 0, 2, 1, 2], [0], [0]>} : vector<1x4x16xf32>, vector<1x4x256xf32>, vector<1x16x256xf32> -> vector<1x16x256xf32>
    %c0_5 = arith.constant 0 : index
    %c0_6 = arith.constant 0 : index
    %c0_7 = arith.constant 0 : index
    %3 = vector.load %arg4[%c0_5, %c0_6, %c0_7] : memref<1x16x256xf32, #tpu.memory_space<vmem>>, vector<1x16x256xf32>
    tpu.vector_store %arg4[%c0_5, %c0_6, %c0_7], %2 {strides = array<i32>} : memref<1x16x256xf32, #tpu.memory_space<vmem>>, vector<1x16x256xf32>,
    return
  }
  func.func @transform_0(%arg0: i32, %arg1: i32) -> (i32, i32, i32) {
    %c0_i32 = arith.constant 0 : i32
    %c0_i32_0 = arith.constant 0 : i32
    %c0_i32_1 = arith.constant 0 : i32
    return %arg0, %c0_i32, %c0_i32_0 : i32, i32, i32
  }
  func.func @transform_1(%arg0: i32, %arg1: i32) -> (i32, i32, i32) {
    %c0_i32 = arith.constant 0 : i32
    %c0_i32_0 = arith.constant 0 : i32
    return %arg0, %c0_i32, %arg1 : i32, i32, i32
  }
  func.func @transform_2(%arg0: i32, %arg1: i32) -> (i32, i32, i32) {
    %c0_i32 = arith.constant 0 : i32
    %c0_i32_0 = arith.constant 0 : i32
    return %arg0, %c0_i32, %arg1 : i32, i32, i32
  }
}

</mosaic_0001>

<llo_original>
// kernel: tpu_custom_call.1
$region0: #{tpu_custom_call.1}
  #allocation0 [shape = 'u32[]', space=smem, size = 0x4, offset = 0x4, fixed_abs, tag = 'smem constant byte address 0x4 - core index']
  #allocation1 [shape = 'u32[144,128]{1,0:T(1,128)}', space=vmem, size = 0x12000, scoped, tag = 'internal scratch']
  %s0 = inlined_call_operand.hbm [shape: f32[2,4,16], index: 0, kind: input, shape index: {}]
  %s1 = inlined_call_operand.hbm [shape: f32[2,4,256], index: 1, kind: input, shape index: {}]
  %s2 = inlined_call_operand.hbm [shape: f32[2,16,256], index: 2, kind: output, shape index: {}]
  %s3 = sld [smem:[#allocation0]]
  $region49: #{tpu_custom_call.1} parent=0
    _
  %s5 = ssub.s32 1, %s3
  %s6 = scalar_select 0, %s5, %s3
  $region1: #{tpu_custom_call.1} parent=0
    #allocation2 [shape = 'u8[4096]{0}', space=vmem, size = 0x1000, scoped, tag = 'input window, operand 0']
    #allocation3 [shape = 's32[2]{0}', space=sflag, size = 0x8, scoped, tag = 'scoped memory for tpu_custom_call.1']
    #allocation4 [shape = 's32[2]{0}', space=sflag, size = 0x8, scoped, tag = 'scoped memory for tpu_custom_call.1']
    #allocation5 [shape = 'u8[8192]{0}', space=vmem, size = 0x2000, scoped, tag = 'input window, operand 1']
    #allocation6 [shape = 's32[2]{0}', space=sflag, size = 0x8, scoped, tag = 'scoped memory for tpu_custom_call.1']
    #allocation7 [shape = 'u8[32768]{0}', space=vmem, size = 0x8000, scoped, tag = 'output window, operand 0']
    %7 = vsyncpa [#allocation3], 0
    %s8 = scalar_lea.sflag [#allocation3], 1
    %9 = vsyncpa %s8, 0
    %10 = vsyncpa [#allocation6], 0
    %s11 = scalar_lea.sflag [#allocation6], 1
    %12 = vsyncpa %s11, 0
    %13 = vsyncpa [#allocation4], 0
    %s14 = scalar_lea.sflag [#allocation4], 1
    %15 = vsyncpa %s14, 0
    loop: start=0, step=1, limit=4
    $region2: #{tpu_custom_call.1} parent=1 // loop_pre_header
      _
    $region3: #{tpu_custom_call.1} parent=1 // loop_header
      %s17 = sphi 0, %s21
      %p18 = scmp.ge.s32.totalorder %s17, 4
      %s24 = sphi 0, %s36
      %s25 = sphi 0, %s32
      %s26 = sphi 0, %s24
      %s27 = sphi 0, %s25
      %s28 = sphi 0, %s26
      %s29 = sphi 0, %s27
      %s39 = sphi 0, %s41
      %s42 = sphi 0, %s39
      %s43 = sphi 0, %s42
      %s59 = sphi 0, %s43
      %s67 = sphi 0, %s69
      %s70 = sphi 0, %s67
      %s71 = sphi 0, %s70
      %s87 = sphi 0, %s71
      %s95 = sphi 0, %s97
      %s98 = sphi 0, %s95
      %s99 = sphi 0, %s98
      %s115 = sphi 0, %s99
    $region4: #{tpu_custom_call.1} parent=1 // loop_header_branch
      %20 = sbr.rel (%p18) target = $region8
    $region5: #{tpu_custom_call.1} parent=1 // loop_body
      %s22 = ssub.s32 %s17, 1
      %s23 = ssub.s32 %s17, 2
      %s30 = sadd.s32 1, %s25
      %p31 = scmp.ge.s32.totalorder %s30, 1
      %s32 = scalar_select %p31, 0, %s30
      %s33 = sadd.s32 1, %s24
      %s34 = scalar_select %p31, %s33, %s24
      %p35 = scmp.ge.s32.totalorder %s34, 2
      %s36 = scalar_select %p35, 0, %s34
      %s37 = ssub.s32 %s24, %s36
      %p38 = scmp.eq.s32.totalorder %s37, 0
      %s40 = sadd.s32 %s39, 1
      %s41 = scalar_select %p38, %s39, %s40
      %p44 = pneg %p38
      %p45 = scmp.eq.s32.totalorder %s17, 1
      %p46 = por %p44, %p45
      %p47 = scmp.ne.s32.totalorder %s39, %s42
      %p48 = scmp.eq.s32.totalorder %s17, 0
      %p49 = por %p47, %p48
      %p50 = scmp.ne.s32.totalorder %s39, %s42
      %p51 = scmp.eq.s32.totalorder %s22, 1
      %p52 = por %p50, %p51
      %p53 = scmp.ne.s32.totalorder %s42, %s43
      %p54 = scmp.eq.s32.totalorder %s22, 0
      %p55 = por %p53, %p54
      %p56 = scmp.ne.s32.totalorder %s42, %s43
      %p57 = scmp.eq.s32.totalorder %s23, 1
      %p58 = por %p56, %p57
      %p60 = scmp.ne.s32.totalorder %s43, %s59
      %p61 = scmp.eq.s32.totalorder %s23, 0
      %p62 = por %p60, %p61
      %s63 = ssub.s32 %s24, %s36
      %s64 = ssub.s32 %s25, %s32
      %s65 = sor.u32 %s63, %s64
      %p66 = scmp.eq.s32.totalorder %s65, 0
      %s68 = sadd.s32 %s67, 1
      %s69 = scalar_select %p66, %s67, %s68
      %p72 = pneg %p66
      %p73 = scmp.eq.s32.totalorder %s17, 1
      %p74 = por %p72, %p73
      %p75 = scmp.ne.s32.totalorder %s67, %s70
      %p76 = scmp.eq.s32.totalorder %s17, 0
      %p77 = por %p75, %p76
      %p78 = scmp.ne.s32.totalorder %s67, %s70
      %p79 = scmp.eq.s32.totalorder %s22, 1
      %p80 = por %p78, %p79
      %p81 = scmp.ne.s32.totalorder %s70, %s71
      %p82 = scmp.eq.s32.totalorder %s22, 0
      %p83 = por %p81, %p82
      %p84 = scmp.ne.s32.totalorder %s70, %s71
      %p85 = scmp.eq.s32.totalorder %s23, 1
      %p86 = por %p84, %p85
      %p88 = scmp.ne.s32.totalorder %s71, %s87
      %p89 = scmp.eq.s32.totalorder %s23, 0
      %p90 = por %p88, %p89
      %s91 = ssub.s32 %s24, %s36
      %s92 = ssub.s32 %s25, %s32
      %s93 = sor.u32 %s91, %s92
      %p94 = scmp.eq.s32.totalorder %s93, 0
      %s96 = sadd.s32 %s95, 1
      %s97 = scalar_select %p94, %s95, %s96
      %p100 = pneg %p94
      %p101 = scmp.eq.s32.totalorder %s17, 1
      %p102 = por %p100, %p101
      %p103 = scmp.ne.s32.totalorder %s95, %s98
      %p104 = scmp.eq.s32.totalorder %s17, 0
      %p105 = por %p103, %p104
      %p106 = scmp.ne.s32.totalorder %s95, %s98
      %p107 = scmp.eq.s32.totalorder %s22, 1
      %p108 = por %p106, %p107
      %p109 = scmp.ne.s32.totalorder %s98, %s99
      %p110 = scmp.eq.s32.totalorder %s22, 0
      %p111 = por %p109, %p110
      %p112 = scmp.ne.s32.totalorder %s98, %s99
      %p113 = scmp.eq.s32.totalorder %s23, 1
      %p114 = por %p112, %p113
      %p116 = scmp.ne.s32.totalorder %s99, %s115
      %p117 = scmp.eq.s32.totalorder %s23, 0
      %p118 = por %p116, %p117
      %p119 = scmp.le.s32.totalorder 1, %s17
      %p120 = scmp.lt.s32.totalorder %s17, 3
      %p121 = pnand %p119, %p120
      %p122 = pneg %p121
      // Predicated region
      $region9: #{tpu_custom_call.1} parent=5 // pred_check
        _
      $region10: #{tpu_custom_call.1} parent=5 // pred_check_branch
        %124 = sbr.rel (%p121) target = $region12
      $region11: #{tpu_custom_call.1} parent=5 // pred_region
        %s125 = ssub.s32 %s17, 1
      $region12: #{tpu_custom_call.1} parent=5 // pred_fallthru
        _
      %p126 = scmp.lt.s32.totalorder %s17, 2
      // Predicated region
      $region13: #{tpu_custom_call.1} parent=5 // pred_check
        %p127 = pneg %p126
      $region14: #{tpu_custom_call.1} parent=5 // pred_check_branch
        %129 = sbr.rel (%p127) target = $region16
      $region15: #{tpu_custom_call.1} parent=5 // pred_region
        // Predicated region
        $region17: #{tpu_custom_call.1} parent=15 // pred_check
          %p130 = pneg %p49
        $region18: #{tpu_custom_call.1} parent=15 // pred_check_branch
          %132 = sbr.rel (%p130) target = $region20
        $region19: #{tpu_custom_call.1} parent=15 // pred_region
          %s133 = sand.u32 %s39, 1
          %s134 = scalar_lea.sflag [#allocation3], %s133
          %s135 = sand.u32 %s39, 1
          %s136 = smul.addr %s135, 4
          %s137 = scalar_lea.vmem [#allocation2], %s136
          %s139 = ssub.s32 64, 64
          %140 = vsyncadd %s134, %s139
          %s141 = smul.addr %s24, 64
          %s142 = scalar_lea.hbm %s0, %s141
          %s144 = sshll.u32 %s137, 4
          %s145 = int_to_ptr.vmem [resolvable:$true] %s144
          %147 = dma.hbm_to_vmem [thread:$0]  %s142, 64, %s145, %s134
        $region20: #{tpu_custom_call.1} parent=15 // pred_fallthru
          _
        // Predicated region
        $region21: #{tpu_custom_call.1} parent=15 // pred_check
          %p148 = pneg %p77
        $region22: #{tpu_custom_call.1} parent=15 // pred_check_branch
          %150 = sbr.rel (%p148) target = $region24
        $region23: #{tpu_custom_call.1} parent=15 // pred_region
          %s151 = sand.u32 %s67, 1
          %s152 = scalar_lea.sflag [#allocation6], %s151
          %s153 = sand.u32 %s67, 1
          %s154 = smul.addr %s153, 8
          %s155 = scalar_lea.vmem [#allocation5], %s154
          %s156 = smul.u32 2, %s25
          %s158 = ssub.s32 128, 128
          %159 = vsyncadd %s152, %s158
          %s160 = smul.addr %s24, 2
          %s161 = sadd.s32 %s156, %s160
          %s162 = smul.addr %s161, 64
          %s163 = scalar_lea.hbm %s1, %s162
          %s165 = sshll.u32 %s155, 4
          %s166 = int_to_ptr.vmem [resolvable:$true] %s165
          %168 = dma.hbm_to_vmem [thread:$0]  %s163, 128, %s166, %s152
        $region24: #{tpu_custom_call.1} parent=15 // pred_fallthru
          _
      $region16: #{tpu_custom_call.1} parent=5 // pred_fallthru
        _
      %p169 = scmp.le.s32.totalorder 1, %s17
      %p170 = scmp.lt.s32.totalorder %s17, 3
      %p171 = pnand %p169, %p170
      %p172 = pneg %p171
      // Predicated region
      $region25: #{tpu_custom_call.1} parent=5 // pred_check
        _
      $region26: #{tpu_custom_call.1} parent=5 // pred_check_branch
        %174 = sbr.rel (%p171) target = $region28
      $region27: #{tpu_custom_call.1} parent=5 // pred_region
        %s175 = ssub.s32 %s17, 1
        %s176 = sand.u32 %s42, 1
        %s177 = scalar_lea.sflag [#allocation3], %s176
        %s178 = sand.u32 %s42, 1
        %s179 = smul.addr %s178, 4
        %s180 = scalar_lea.vmem [#allocation2], %s179
        // Predicated region
        $region29: #{tpu_custom_call.1} parent=27 // pred_check
          %p181 = pneg %p55
        $region30: #{tpu_custom_call.1} parent=27 // pred_check_branch
          %183 = sbr.rel (%p181) target = $region32
        $region31: #{tpu_custom_call.1} parent=27 // pred_region
          %184 = dma.done %s177, 64
        $region32: #{tpu_custom_call.1} parent=27 // pred_fallthru
          _
        %s185 = sand.u32 %s70, 1
        %s186 = scalar_lea.sflag [#allocation6], %s185
        %s187 = sand.u32 %s70, 1
        %s188 = smul.addr %s187, 8
        %s189 = scalar_lea.vmem [#allocation5], %s188
        // Predicated region
        $region33: #{tpu_custom_call.1} parent=27 // pred_check
          %p190 = pneg %p83
        $region34: #{tpu_custom_call.1} parent=27 // pred_check_branch
          %192 = sbr.rel (%p190) target = $region36
        $region35: #{tpu_custom_call.1} parent=27 // pred_region
          %193 = dma.done %s186, 128
        $region36: #{tpu_custom_call.1} parent=27 // pred_fallthru
          _
        %s194 = sand.u32 %s42, 1
        %s195 = scalar_lea.sflag [#allocation3], %s194
        %s196 = sand.u32 %s42, 1
        %s197 = smul.addr %s196, 4
        %s198 = scalar_lea.vmem [#allocation2], %s197
        %p199 = pneg %p55
        %p200 = pneg %p52
        %s201 = sand.u32 %s70, 1
        %s202 = scalar_lea.sflag [#allocation6], %s201
        %s203 = sand.u32 %s70, 1
        %s204 = smul.addr %s203, 8
        %s205 = scalar_lea.vmem [#allocation5], %s204
        %p206 = pneg %p83
        %p207 = pneg %p80
        %p208 = pneg %p111
        %p209 = pneg %p108
        %s210 = sand.u32 %s98, 1
        %s211 = scalar_lea.sflag [#allocation4], %s210
        %s212 = sand.u32 %s98, 1
        %s213 = smul.addr %s212, 32
        %s214 = scalar_lea.vmem [#allocation7], %s213
        %s215 = smul.u32 2, %s27
        %s216 = smul.u32 2, %s27
        %v217 = vld [vmem:[%s180] sm:$0xf]
        %v218 = vld [vmem:[%s189] sm:$0xff]
        %219 = vxpose.xlu0.b32.start [1/16] %v217, 128
        %220 = vxpose.xlu0.b32.cont [2/16] 0.0, 128
        %221 = vxpose.xlu0.b32.cont [3/16] 0.0, 128
        %222 = vxpose.xlu0.b32.cont [4/16] 0.0, 128
        %223 = vxpose.xlu0.b32.cont [5/16] 0.0, 128
        %224 = vxpose.xlu0.b32.cont [6/16] 0.0, 128
        %225 = vxpose.xlu0.b32.cont [7/16] 0.0, 128
        %226 = vxpose.xlu0.b32.cont [8/16] 0.0, 128
        %227 = vxpose.xlu0.b32.cont [9/16] 0.0, 128
        %228 = vxpose.xlu0.b32.cont [10/16] 0.0, 128
        %229 = vxpose.xlu0.b32.cont [11/16] 0.0, 128
        %230 = vxpose.xlu0.b32.cont [12/16] 0.0, 128
        %231 = vxpose.xlu0.b32.cont [13/16] 0.0, 128
        %232 = vxpose.xlu0.b32.cont [14/16] 0.0, 128
        %233 = vxpose.xlu0.b32.cont [15/16] 0.0, 128
        %234 = vxpose.xlu0.b32.end [16/16] 0.0, 128
        %v235 = vpop.trf.xlu0
        %v236 = vpop.trf.xlu0
        %v237 = vpop.trf.xlu0
        %v238 = vpop.trf.xlu0
        %v239 = vpop.trf.xlu0
        %v240 = vpop.trf.xlu0
        %v241 = vpop.trf.xlu0
        %v242 = vpop.trf.xlu0
        %v243 = vpop.trf.xlu0
        %v244 = vpop.trf.xlu0
        %v245 = vpop.trf.xlu0
        %v246 = vpop.trf.xlu0
        %v247 = vpop.trf.xlu0
        %v248 = vpop.trf.xlu0
        %v249 = vpop.trf.xlu0
        %v250 = vpop.trf.xlu0
        %v252 = vcombine.high %v218, %v218
        %vm253 = vcmask 31744
        %v255 = vsel %vm253, %v235, 0
        %v258 = vsel %vm253, %v236, 0
        %vm260 = vcmask 1043456
        %v261 = vsel %vm260, %v218, 0
        %v263 = vsel %vm260, %v252, 0
        %265 = vmatprep.subr.mxu0 0.0
        %266 = vmatpush1.msra.mxu0 0.0
        %267 = vmatprep.subr.mxu0 0.0
        %268 = vmatpush1.msra.mxu0 0.0
        %269 = vmatprep.subr.mxu0 0.0
        %270 = vmatpush1.msra.mxu0 0.0
        %271 = vmatprep.subr.mxu0 0.0
        %272 = vmatpush1.msra.mxu0 0.0
        %273 = vmatprep.subr.mxu0 0.0
        %274 = vmatpush1.msra.mxu0 0.0
        %275 = vmatprep.subr.mxu0 0.0
        %276 = vmatpush1.msra.mxu0 0.0
        %277 = vmatprep.subr.mxu0 0.0
        %278 = vmatpush1.msra.mxu0 0.0
        %279 = vmatprep.subr.mxu0 0.0
        %280 = vmatpush1.msra.mxu0 0.0
        %281 = vmatprep.subr.mxu0 0.0
        %282 = vmatpush1.msra.mxu0 0.0
        %283 = vmatprep.subr.mxu0 0.0
        %284 = vmatpush1.msra.mxu0 0.0
        %285 = vmatprep.subr.mxu0 0.0
        %286 = vmatpush1.msra.mxu0 0.0
        %287 = vmatprep.subr.mxu0 0.0
        %288 = vmatpush1.msra.mxu0 0.0
        %289 = vmatprep.subr.mxu0 0.0
        %290 = vmatpush1.msra.mxu0 0.0
        %291 = vmatprep.subr.mxu0 0.0
        %292 = vmatpush1.msra.mxu0 0.0
        %293 = vmatprep.subr.mxu0 0.0
        %294 = vmatpush1.msra.mxu0 0.0
        %295 = vmatprep.subr.mxu0 %v263
        %296 = vmatpush1.msra.mxu0 %v261
        %297 = vmatprep.subr.mxu0 0.0
        %298 = vmatpush2.msra.mxu0 0.0
        %299 = vmatprep.subr.mxu0 0.0
        %300 = vmatpush2.msra.mxu0 0.0
        %301 = vmatprep.subr.mxu0 0.0
        %302 = vmatpush2.msra.mxu0 0.0
        %303 = vmatprep.subr.mxu0 0.0
        %304 = vmatpush2.msra.mxu0 0.0
        %305 = vmatprep.subr.mxu0 0.0
        %306 = vmatpush2.msra.mxu0 0.0
        %307 = vmatprep.subr.mxu0 0.0
        %308 = vmatpush2.msra.mxu0 0.0
        %309 = vmatprep.subr.mxu0 0.0
        %310 = vmatpush2.msra.mxu0 0.0
        %311 = vmatprep.subr.mxu0 0.0
        %312 = vmatpush2.msra.mxu0 0.0
        %313 = vmatprep.subr.mxu0 0.0
        %314 = vmatpush2.msra.mxu0 0.0
        %315 = vmatprep.subr.mxu0 0.0
        %316 = vmatpush2.msra.mxu0 0.0
        %317 = vmatprep.subr.mxu0 0.0
        %318 = vmatpush2.msra.mxu0 0.0
        %319 = vmatprep.subr.mxu0 0.0
        %320 = vmatpush2.msra.mxu0 0.0
        %321 = vmatprep.subr.mxu0 0.0
        %322 = vmatpush2.msra.mxu0 0.0
        %323 = vmatprep.subr.mxu0 0.0
        %324 = vmatpush2.msra.mxu0 0.0
        %325 = vmatprep.subr.mxu0 0.0
        %326 = vmatpush2.msra.mxu0 0.0
        %327 = vmatprep.subr.mxu0 0.0
        %328 = vmatpush2.msra.mxu0 0.0
        %329 = vmatprep.mubr.f32.mxu0 0.0
        %330 = vmatmul.mubr.f32.gmra.mxu0 %v255
        %v331 = vpop.f32.mrf.mxu0
        %v332 = vadd.f32 0.0, %v331
        %v333 = vpop.f32.mrf.mxu0
        %v334 = vadd.f32 0.0, %v333
        %335 = vmatprep.mubr.f32.mxu0 0.0
        %336 = vmatmul.mubr.f32.gmra.mxu0 %v258
        %v337 = vpop.f32.mrf.mxu0
        %v338 = vadd.f32 0.0, %v337
        %v339 = vpop.f32.mrf.mxu0
        %v340 = vadd.f32 0.0, %v339
        %341 = vdwg.mxu0
        %342 = vst [vmem:[%s214] sm:$0xff] %v332
        %343 = vst [vmem:[%s214 + $0x8] sm:$0xff] %v334
        %344 = vst [vmem:[%s214 + $0x10] sm:$0xff] %v338
        %345 = vst [vmem:[%s214 + $0x18] sm:$0xff] %v340
        %s346 = sand.u32 %s98, 1
        %s347 = scalar_lea.sflag [#allocation4], %s346
        %s348 = sand.u32 %s98, 1
        %s349 = smul.addr %s348, 32
        %s350 = scalar_lea.vmem [#allocation7], %s349
        // Predicated region
        $region37: #{tpu_custom_call.1} parent=27 // pred_check
          %p351 = pneg %p108
        $region38: #{tpu_custom_call.1} parent=27 // pred_check_branch
          %353 = sbr.rel (%p351) target = $region40
        $region39: #{tpu_custom_call.1} parent=27 // pred_region
          %s354 = smul.u32 2, %s27
          %s356 = ssub.s32 512, 512
          %357 = vsyncadd %s347, %s356
          %s358 = smul.addr %s26, 4
          %s359 = sadd.s32 %s354, %s358
          %s360 = smul.addr %s359, 128
          %s361 = scalar_lea.hbm %s2, %s360
          %s362 = sshll.u32 %s350, 4
          %s363 = int_to_ptr.vmem [resolvable:$true] %s362
          %368 = dma.vmem_to_hbm [thread:$0]  %s363, 512, %s361, %s347, 256, 256, 16
        $region40: #{tpu_custom_call.1} parent=27 // pred_fallthru
          _
      $region28: #{tpu_custom_call.1} parent=5 // pred_fallthru
        _
      %p369 = scmp.le.s32.totalorder 2, %s17
      // Predicated region
      $region41: #{tpu_custom_call.1} parent=5 // pred_check
        %p370 = pneg %p369
      $region42: #{tpu_custom_call.1} parent=5 // pred_check_branch
        %372 = sbr.rel (%p370) target = $region44
      $region43: #{tpu_custom_call.1} parent=5 // pred_region
        %s373 = ssub.s32 %s17, 2
        // Predicated region
        $region45: #{tpu_custom_call.1} parent=43 // pred_check
          %p374 = pneg %p114
        $region46: #{tpu_custom_call.1} parent=43 // pred_check_branch
          %376 = sbr.rel (%p374) target = $region48
        $region47: #{tpu_custom_call.1} parent=43 // pred_region
          %s377 = sand.u32 %s99, 1
          %s378 = scalar_lea.sflag [#allocation4], %s377
          %s379 = sand.u32 %s99, 1
          %s380 = smul.addr %s379, 32
          %s381 = scalar_lea.vmem [#allocation7], %s380
          %382 = dma.done %s378, 512
        $region48: #{tpu_custom_call.1} parent=43 // pred_fallthru
          _
      $region44: #{tpu_custom_call.1} parent=5 // pred_fallthru
        _
    $region6: #{tpu_custom_call.1} parent=1 // loop_footer
      %s21 = sadd.s32 1, %s17
    $region7: #{tpu_custom_call.1} parent=1 // loop_footer_branch
      %16 = sbr.rel target = $region3
    $region8: #{tpu_custom_call.1} parent=1 // loop_exit
      _
    %383 = vsyncpa [#allocation3], 1
    %s384 = scalar_lea.sflag [#allocation3], 1
    %385 = vsyncpa %s384, 1
    %386 = vsyncpa [#allocation6], 1
    %s387 = scalar_lea.sflag [#allocation6], 1
    %388 = vsyncpa %s387, 1
    %389 = vsyncpa [#allocation4], 1
    %s390 = scalar_lea.sflag [#allocation4], 1
    %391 = vsyncpa %s390, 1

</llo_original>
